<compile_context>
chip_gen: v7x
topology: tpu7x:2x2x1
jax: 0.10.0
libtpu: 0.0.40
codegen_flags: <defaults>
</compile_context>

<pallas_src>
import math

import jax
import jax.numpy as jnp
from jax.experimental import pallas as pl
from jax.experimental.pallas import tpu as pltpu


def _round_up(x, m):
    return ((x + m - 1) // m) * m


_GATE_SLAB = (0, 1, 3, 2)   # torch gate order (i, f, g, o) -> packed slab order (i, f, o, g)


# --------------------------------------------------------------------------
# Pallas kernels
# --------------------------------------------------------------------------
def _proj1_kernel(x_ref, w_ref, b_ref, out_ref):
    """g = x @ W_ih + b for one (direction, M-tile); single-input layers."""
    acc = jnp.dot(x_ref[...], w_ref[...], preferred_element_type=jnp.float32)
    out_ref[...] = (acc + b_ref[...]).astype(out_ref.dtype)


def _proj2_kernel(xf_ref, xb_ref, wf_ref, wb_ref, b_ref, out_ref):
    """g = x_fwd @ W_a + x_bwd @ W_b + b for layers > 0 of a bidirectional stack."""
    acc = jnp.dot(xf_ref[...], wf_ref[...], preferred_element_type=jnp.float32)
    acc = acc + jnp.dot(xb_ref[...], wb_ref[...], preferred_element_type=jnp.float32)
    out_ref[...] = (acc + b_ref[...]).astype(out_ref.dtype)


def _make_rec_kernel(*, tc, hp, nchunks, t_real, t_pad, bidirectional):
    """Recurrent kernel: tc time steps / grid step, fwd+bwd interleaved per step."""
    unroll = min(tc, 8)
    needs_mask = (t_pad != t_real)

    def cell(gates, c):
        # gates: (Bp, 4*Hp) f32, packed (i, f, o, g).
        # sigmoid(x) = 0.5*tanh(0.5*x)+0.5: one EUP op covers the i|f|o slab.
        sig = 0.5 * jnp.tanh(0.5 * gates[:, :3 * hp]) + 0.5
        i = sig[:, 0 * hp:1 * hp]
        f = sig[:, 1 * hp:2 * hp]
        o = sig[:, 2 * hp:3 * hp]
        g = jnp.tanh(gates[:, 3 * hp:4 * hp])
        c_new = f * c + i * g
        h_new = o * jnp.tanh(c_new)
        return h_new, c_new

    if bidirectional:
        def kernel(gf_ref, gb_ref, wf_ref, wb_ref, of_ref, ob_ref,
                   hf_ref, cf_ref, hb_ref, cb_ref):
            t = pl.program_id(0)

            @pl.when(t == 0)
            def _():
                hf_ref[...] = jnp.zeros_like(hf_ref)
                cf_ref[...] = jnp.zeros_like(cf_ref)
                hb_ref[...] = jnp.zeros_like(hb_ref)
                cb_ref[...] = jnp.zeros_like(cb_ref)

            def step(s, carry):
                hf, cf, hb, cb = carry
                # Forward direction: chunk t, in-chunk time s.
                gates_f = gf_ref[s].astype(jnp.float32) + jnp.dot(
                    hf, wf_ref[...], preferred_element_type=jnp.float32)
                # Backward direction: chunk nchunks-1-t, in-chunk time tc-1-s.
                sb = tc - 1 - s
                gates_b = gb_ref[sb].astype(jnp.float32) + jnp.dot(
                    hb, wb_ref[...], preferred_element_type=jnp.float32)
                hf_new, cf_new = cell(gates_f, cf)
                hb_new, cb_new = cell(gates_b, cb)
                hf_new = hf_new.astype(jnp.bfloat16)
                hb_new = hb_new.astype(jnp.bfloat16)
                if needs_mask:
                    # Time-padded tail steps are processed FIRST by the backward
                    # direction; keep its state pinned at zero through them.
                    valid_b = (nchunks - 1 - t) * tc + sb < t_real
                    hb_new = jnp.where(valid_b, hb_new, hb)
                    cb_new = jnp.where(valid_b, cb_new, cb)
                of_ref[s] = hf_new
                ob_ref[sb] = hb_new
                return hf_new, cf_new, hb_new, cb_new

            carry = (hf_ref[...].astype(jnp.bfloat16), cf_ref[...],
                     hb_ref[...].astype(jnp.bfloat16), cb_ref[...])
            hf, cf, hb, cb = jax.lax.fori_loop(0, tc, step, carry, unroll=unroll)
            hf_ref[...] = hf.astype(jnp.float32)
            cf_ref[...] = cf
            hb_ref[...] = hb.astype(jnp.float32)
            cb_ref[...] = cb

        return kernel

    def kernel(gf_ref, wf_ref, of_ref, hf_ref, cf_ref):
        t = pl.program_id(0)

        @pl.when(t == 0)
        def _():
            hf_ref[...] = jnp.zeros_like(hf_ref)
            cf_ref[...] = jnp.zeros_like(cf_ref)

        def step(s, carry):
            hf, cf = carry
            gates_f = gf_ref[s].astype(jnp.float32) + jnp.dot(
                hf, wf_ref[...], preferred_element_type=jnp.float32)
            hf_new, cf_new = cell(gates_f, cf)
            hf_new = hf_new.astype(jnp.bfloat16)
            of_ref[s] = hf_new
            return hf_new, cf_new

        carry = (hf_ref[...].astype(jnp.bfloat16), cf_ref[...])
        hf, cf = jax.lax.fori_loop(0, tc, step, carry, unroll=unroll)
        hf_ref[...] = hf.astype(jnp.float32)
        cf_ref[...] = cf

    return kernel


def _head_kernel(h_ref, wfc_ref, bfc_ref, wlab_ref, blab_ref, out_ref):
    """fc(Hp->128) -> relu -> label(128->OUT_pad), f32."""
    h = h_ref[...].astype(jnp.float32)
    z = jnp.dot(h, wfc_ref[...], preferred_element_type=jnp.float32) + bfc_ref[...]
    z = jnp.maximum(z, 0.0)
    out_ref[...] = jnp.dot(z, wlab_ref[...],
                           preferred_element_type=jnp.float32) + blab_ref[...]


# --------------------------------------------------------------------------
# Pallas wrappers
# --------------------------------------------------------------------------
def proj1_pallas(x2d, wih, bias, *, tm):
    """x2d: (M, Din) bf16; wih: (ND, Din, 4*Hp) bf16; bias: (ND, 1, 4*Hp) f32."""
    m, din = x2d.shape
    nd, _, g4 = wih.shape
    nmt = m // tm
    return pl.pallas_call(
        _proj1_kernel,
        out_shape=jax.ShapeDtypeStruct((nd, m, g4), jnp.bfloat16),
        grid=(nd, nmt),
        in_specs=[
            pl.BlockSpec((tm, din), lambda d, i: (i, 0)),
            pl.BlockSpec((None, din, g4), lambda d, i: (d, 0, 0)),
            pl.BlockSpec((None, 1, g4), lambda d, i: (d, 0, 0)),
        ],
        out_specs=pl.BlockSpec((None, tm, g4), lambda d, i: (d, i, 0)),
        compiler_params=pltpu.CompilerParams(
            dimension_semantics=("parallel", "parallel")),
    )(x2d, wih, bias)


def proj2_pallas(xf, xb, wih_a, wih_b, bias, *, tm):
    """Two-input projection (prev layer fwd/bwd slabs summed)."""
    m, hp_in = xf.shape
    nd, _, g4 = wih_a.shape
    nmt = m // tm
    return pl.pallas_call(
        _proj2_kernel,
        out_shape=jax.ShapeDtypeStruct((nd, m, g4), jnp.bfloat16),
        grid=(nd, nmt),
        in_specs=[
            pl.BlockSpec((tm, hp_in), lambda d, i: (i, 0)),
            pl.BlockSpec((tm, hp_in), lambda d, i: (i, 0)),
            pl.BlockSpec((None, hp_in, g4), lambda d, i: (d, 0, 0)),
            pl.BlockSpec((None, hp_in, g4), lambda d, i: (d, 0, 0)),
            pl.BlockSpec((None, 1, g4), lambda d, i: (d, 0, 0)),
        ],
        out_specs=pl.BlockSpec((None, tm, g4), lambda d, i: (d, i, 0)),
        compiler_params=pltpu.CompilerParams(
            dimension_semantics=("parallel", "parallel")),
    )(xf, xb, wih_a, wih_b, bias)


def lstm_recurrence_pallas(g, whh, *, tc, t_real, bidirectional):
    """g: (ND, T_pad, Bp, 4*Hp) bf16; whh: (ND, Hp, 4*Hp) bf16.

    Returns lane-dense per-direction hidden sequences (T_pad, Bp, Hp) bf16:
    (out_fwd, out_bwd) if bidirectional else out_fwd.
    """
    nd, t_pad, bp, g4 = g.shape
    hp = g4 // 4
    nchunks = t_pad // tc
    kernel = _make_rec_kernel(tc=tc, hp=hp, nchunks=nchunks, t_real=t_real,
                              t_pad=t_pad, bidirectional=bidirectional)
    out_sd = jax.ShapeDtypeStruct((t_pad, bp, hp), jnp.bfloat16)
    g_spec_f = pl.BlockSpec((None, tc, bp, g4), lambda t: (0, t, 0, 0))
    w_spec_f = pl.BlockSpec((None, hp, g4), lambda t: (0, 0, 0))
    o_spec_f = pl.BlockSpec((tc, bp, hp), lambda t: (t, 0, 0))
    cparams = pltpu.CompilerParams(dimension_semantics=("arbitrary",))

    if not bidirectional:
        return pl.pallas_call(
            kernel,
            out_shape=out_sd,
            grid=(nchunks,),
            in_specs=[g_spec_f, w_spec_f],
            out_specs=o_spec_f,
            scratch_shapes=[pltpu.VMEM((bp, hp), jnp.float32)
                            for _ in range(2)],          # h, c
            compiler_params=cparams,
        )(g, whh)

    g_spec_b = pl.BlockSpec((None, tc, bp, g4), lambda t: (1, nchunks - 1 - t, 0, 0))
    w_spec_b = pl.BlockSpec((None, hp, g4), lambda t: (1, 0, 0))
    o_spec_b = pl.BlockSpec((tc, bp, hp), lambda t: (nchunks - 1 - t, 0, 0))
    return pl.pallas_call(
        kernel,
        out_shape=(out_sd, out_sd),
        grid=(nchunks,),
        in_specs=[g_spec_f, g_spec_b, w_spec_f, w_spec_b],
        out_specs=(o_spec_f, o_spec_b),
        scratch_shapes=[pltpu.VMEM((bp, hp), jnp.float32)
                        for _ in range(4)],              # h_f, c_f, h_b, c_b
        compiler_params=cparams,
    )(g, g, whh, whh)


def head_pallas(h_last, w_fc, b_fc, w_lab, b_lab):
    bp = h_last.shape[0]
    outp = w_lab.shape[1]
    return pl.pallas_call(
        _head_kernel,
        out_shape=jax.ShapeDtypeStruct((bp, outp), jnp.float32),
    )(h_last, w_fc, b_fc, w_lab, b_lab)


# --------------------------------------------------------------------------
# Model driver (glue)
# --------------------------------------------------------------------------
def forward_pallas(x_btd, params, *, hidden_size, num_layers, output_size,
                   bidirectional, time_chunk=None):
    """Full forward: stacked (bi)LSTM -> h_n[-1] -> fc -> relu -> label."""
    b, t_len, _ = x_btd.shape
    nd = 2 if bidirectional else 1
    hp = _round_up(hidden_size, 128)
    bp = _round_up(b, 8)

    if time_chunk is None:
        tc = min(64, _round_up(t_len, 8))
    else:
        tc = max(1, int(time_chunk))
    t_pad = _round_up(t_len, tc)
    m = t_pad * bp
    tm = tc * bp
    while tm > 1024:           # keep projection blocks VMEM-friendly (v7x)
        tm //= 2

    # One-time transpose to time-major, pad batch -> Bp and time -> T_pad, bf16.
    x_tm = jnp.transpose(x_btd, (1, 0, 2)).astype(jnp.bfloat16)    # (T, B, Din)
    x_tm = jnp.pad(x_tm, ((0, t_pad - t_len), (0, bp - b), (0, 0)))

    cur_f = x_tm.reshape(m, x_tm.shape[-1])
    cur_b = None
    out_f = out_b = None
    for l in range(num_layers):
        p = params["lstm"][l]
        if cur_b is None:
            g = proj1_pallas(cur_f, p["wih_a"], p["bias"], tm=tm)
        else:
            g = proj2_pallas(cur_f, cur_b, p["wih_a"], p["wih_b"], p["bias"], tm=tm)
        g = g.reshape(nd, t_pad, bp, 4 * hp)
        if bidirectional:
            out_f, out_b = lstm_recurrence_pallas(
                g, p["whh"], tc=tc, t_real=t_len, bidirectional=True)
            cur_f = out_f.reshape(m, hp)
            cur_b = out_b.reshape(m, hp)
        else:
            out_f = lstm_recurrence_pallas(
                g, p["whh"], tc=tc, t_real=t_len, bidirectional=False)
            cur_f = out_f.reshape(m, hp)

    # h_n[-1]: final hidden of the last direction of the last layer.
    # Backward direction's final hidden is its output at time 0.
    h_last = out_b[0] if bidirectional else out_f[t_len - 1]
    # nn.Dropout(0.1) on h_n is identity at inference (eval semantics).

    w_fc, b_fc = params["fc"]
    w_lab, b_lab = params["label"]
    out = head_pallas(h_last, w_fc, b_fc, w_lab, b_lab)            # (Bp, OUT_pad)
    return out[:b, :output_size]


# --------------------------------------------------------------------------
# Parameter init (torch-layout) and packing into the padded fused layout
# --------------------------------------------------------------------------
def init_raw_params(key, input_size, hidden_size, num_layers, output_size,
                    bidirectional):
    """PyTorch-layout weights with the default uniform(-1/sqrt(H), 1/sqrt(H))."""
    h = hidden_size
    nd = 2 if bidirectional else 1
    k = 1.0 / math.sqrt(h)
    raw = {}
    for l in range(num_layers):
        din = input_size if l == 0 else h * nd
        for d in range(nd):
            key, k1, k2, k3, k4 = jax.random.split(key, 5)
            raw[(l, d)] = dict(
                w_ih=jax.random.uniform(k1, (4 * h, din), minval=-k, maxval=k),
                w_hh=jax.random.uniform(k2, (4 * h, h), minval=-k, maxval=k),
                b_ih=jax.random.uniform(k3, (4 * h,), minval=-k, maxval=k),
                b_hh=jax.random.uniform(k4, (4 * h,), minval=-k, maxval=k),
            )
    key, kf1, kf2, kl1, kl2 = jax.random.split(key, 5)
    raw["fc"] = (jax.random.uniform(kf1, (128, h), minval=-k, maxval=k),
                 jax.random.uniform(kf2, (128,), minval=-k, maxval=k))
    kl = 1.0 / math.sqrt(128)
    raw["label"] = (
        jax.random.uniform(kl1, (output_size, 128), minval=-kl, maxval=kl),
        jax.random.uniform(kl2, (output_size,), minval=-kl, maxval=kl))
    return raw


def pack_params(raw, *, input_size, hidden_size, num_layers, output_size,
                bidirectional):
    """Repack torch-layout weights into the padded, fused bf16 kernel layout."""
    h = hidden_size
    hp = _round_up(h, 128)
    nd = 2 if bidirectional else 1
    outp = _round_up(output_size, 128)

    lstm = []
    for l in range(num_layers):
        if l == 0:
            wih_a = jnp.zeros((nd, input_size, 4 * hp), jnp.float32)
            wih_b = None
        else:
            wih_a = jnp.zeros((nd, hp, 4 * hp), jnp.float32)
            wih_b = jnp.zeros((nd, hp, 4 * hp), jnp.float32) if nd == 2 else None
        whh = jnp.zeros((nd, hp, 4 * hp), jnp.float32)
        bias = jnp.zeros((nd, 1, 4 * hp), jnp.float32)
        for d in range(nd):
            r = raw[(l, d)]
            wih_t = r["w_ih"].T                       # (din, 4h)
            whh_t = r["w_hh"].T                       # (h, 4h)
            bsum = r["b_ih"] + r["b_hh"]              # (4h,)
            for gi in range(4):
                col = _GATE_SLAB[gi] * hp
                src = slice(gi * h, (gi + 1) * h)
                if l == 0:
                    wih_a = wih_a.at[d, :, col:col + h].set(wih_t[:, src])
                else:
                    wih_a = wih_a.at[d, :h, col:col + h].set(wih_t[:h, src])
                    if wih_b is not None:
                        wih_b = wih_b.at[d, :h, col:col + h].set(
                            wih_t[h:2 * h, src])
                whh = whh.at[d, :h, col:col + h].set(whh_t[:, src])
                bias = bias.at[d, 0, col:col + h].set(bsum[src])
        lstm.append(dict(
            wih_a=wih_a.astype(jnp.bfloat16),
            wih_b=None if wih_b is None else wih_b.astype(jnp.bfloat16),
            whh=whh.astype(jnp.bfloat16),
            bias=bias))                                # bias kept in f32

    w_fc, b_fc = raw["fc"]                             # (128, H), (128,)
    w_fc_p = jnp.zeros((hp, 128), jnp.float32).at[:h, :].set(w_fc.T)
    b_fc_p = b_fc.reshape(1, 128).astype(jnp.float32)
    w_lab, b_lab = raw["label"]                        # (out, 128), (out,)
    w_lab_p = jnp.zeros((128, outp), jnp.float32).at[:, :output_size].set(w_lab.T)
    b_lab_p = jnp.zeros((1, outp), jnp.float32).at[0, :output_size].set(b_lab)
    return {"lstm": lstm, "fc": (w_fc_p, b_fc_p), "label": (w_lab_p, b_lab_p)}


# --------------------------------------------------------------------------
# Pure-JAX f32 reference on UNPADDED torch-layout weights (correctness only)
# --------------------------------------------------------------------------
def forward_reference(x_btd, raw, *, hidden_size, num_layers, output_size,
                      bidirectional):
    h_sz = hidden_size
    nd = 2 if bidirectional else 1
    b = x_btd.shape[0]
    layer_in = jnp.transpose(x_btd, (1, 0, 2))     # (T, B, Din)
    h_last = None
    for l in range(num_layers):
        outs = []
        for d in range(nd):
            r = raw[(l, d)]
            w_ih, w_hh = r["w_ih"], r["w_hh"]
            bias = r["b_ih"] + r["b_hh"]
            xin = layer_in[::-1] if d == 1 else layer_in

            def step(carry, x_t, w_ih=w_ih, w_hh=w_hh, bias=bias):
                hh, cc = carry
                gates = x_t @ w_ih.T + hh @ w_hh.T + bias
                i = jax.nn.sigmoid(gates[:, 0 * h_sz:1 * h_sz])
                f = jax.nn.sigmoid(gates[:, 1 * h_sz:2 * h_sz])
                g = jnp.tanh(gates[:, 2 * h_sz:3 * h_sz])
                o = jax.nn.sigmoid(gates[:, 3 * h_sz:4 * h_sz])
                cc = f * cc + i * g
                hh = o * jnp.tanh(cc)
                return (hh, cc), hh

            init = (jnp.zeros((b, h_sz), jnp.float32),
                    jnp.zeros((b, h_sz), jnp.float32))
            (hf, _), seq = jax.lax.scan(step, init, xin)
            if d == 1:
                seq = seq[::-1]
            outs.append(seq)
            h_last = hf
        layer_in = jnp.concatenate(outs, axis=-1) if nd == 2 else outs[0]
    w_fc, b_fc = raw["fc"]
    w_lab, b_lab = raw["label"]
    z = jnp.maximum(h_last @ w_fc.T + b_fc, 0.0)
    return z @ w_lab.T + b_lab


# --------------------------------------------------------------------------
if __name__ == "__main__":
    input_size, hidden_size = 16, 32
    # (B, T, num_layers, output_size, bidirectional, time_chunk)
    configs = [
        (2, 8, 2, 8, True, None),    # primary: bidirectional, single chunk
        (3, 11, 2, 8, True, 8),      # multi-chunk + tail-step masking (T % tc != 0)
        (2, 10, 1, 8, False, None),  # unidirectional path
    ]

    key = jax.random.PRNGKey(0)
    for (B, T, num_layers, output_size, bidirectional, tchunk) in configs:
        key, kx, kp = jax.random.split(key, 3)
        x = jax.random.normal(kx, (B, T, input_size), dtype=jnp.float32)

        raw = init_raw_params(kp, input_size, hidden_size, num_layers,
                              output_size, bidirectional)
        params = pack_params(raw, input_size=input_size,
                             hidden_size=hidden_size, num_layers=num_layers,
                             output_size=output_size,
                             bidirectional=bidirectional)

        out = forward_pallas(x, params, hidden_size=hidden_size,
                             num_layers=num_layers, output_size=output_size,
                             bidirectional=bidirectional, time_chunk=tchunk)
        out = jax.block_until_ready(out)

        ref = forward_reference(x, raw, hidden_size=hidden_size,
                                num_layers=num_layers,
                                output_size=output_size,
                                bidirectional=bidirectional)
        assert out.shape == (B, output_size), out.shape
        max_err = float(jnp.max(jnp.abs(out - ref)))
        # bf16 weights / activations vs. the exact f32 reference -> loosened tol.
        assert jnp.allclose(out, ref, rtol=5e-2, atol=5e-2), (
            f"mismatch (B={B}, T={T}, layers={num_layers}, "
            f"bidir={bidirectional}): max abs err {max_err}")

    print("KERNEL_OK")
</pallas_src>

<mosaic_0001>
module attributes {stable_mosaic.version = 11 : i64} {
  func.func @_proj1_kernel(%arg0: i32, %arg1: i32, %arg2: memref<64x16xbf16, #tpu.memory_space<vmem>>, %arg3: memref<1x16x512xbf16, #tpu.memory_space<vmem>>, %arg4: memref<1x1x512xf32, #tpu.memory_space<vmem>>, %arg5: memref<1x64x512xbf16, #tpu.memory_space<vmem>>) attributes {dimension_semantics = [#tpu.dimension_semantics<parallel>, #tpu.dimension_semantics<parallel>], iteration_bounds = array<i64: 2, 1>, scalar_prefetch = 0 : i64, scratch_operands = 0 : i64, tpu.core_type = #tpu.core_type<tc>, window_params = [{transform_indices = @transform_0, window_bounds = array<i64: 64, 16>}, {transform_indices = @transform_1, window_bounds = array<i64: 1, 16, 512>}, {transform_indices = @transform_2, window_bounds = array<i64: 1, 1, 512>}, {transform_indices = @transform_3, window_bounds = array<i64: 1, 64, 512>}]} {
    %c0 = arith.constant 0 : index
    %c0_0 = arith.constant 0 : index
    %0 = vector.load %arg2[%c0, %c0_0] : memref<64x16xbf16, #tpu.memory_space<vmem>>, vector<64x16xbf16>
    %c0_1 = arith.constant 0 : index
    %c0_2 = arith.constant 0 : index
    %c0_3 = arith.constant 0 : index
    %1 = vector.load %arg3[%c0_1, %c0_2, %c0_3] : memref<1x16x512xbf16, #tpu.memory_space<vmem>>, vector<1x16x512xbf16>
    %2 = vector.shape_cast %1 : vector<1x16x512xbf16> to vector<16x512xbf16>
    %cst = arith.constant dense<0.000000e+00> : vector<64x512xf32>
    %3 = tpu.matmul %0, %2, %cst {dimension_numbers = #tpu.dot_dimension_numbers<[1], [0], [0], [1], [0, 0, 1, 1], [], []>} : vector<64x16xbf16>, vector<16x512xbf16>, vector<64x512xf32> -> vector<64x512xf32>
    %c0_4 = arith.constant 0 : index
    %c0_5 = arith.constant 0 : index
    %c0_6 = arith.constant 0 : index
    %4 = vector.load %arg4[%c0_4, %c0_5, %c0_6] : memref<1x1x512xf32, #tpu.memory_space<vmem>>, vector<1x1x512xf32>
    %5 = vector.shape_cast %4 : vector<1x1x512xf32> to vector<1x512xf32>
    %6 = vector.broadcast %5 : vector<1x512xf32> to vector<64x512xf32>
    %7 = arith.addf %3, %6 : vector<64x512xf32>
    %8 = arith.truncf %7 : vector<64x512xf32> to vector<64x512xbf16>
    %c0_7 = arith.constant 0 : index
    %c0_8 = arith.constant 0 : index
    %c0_9 = arith.constant 0 : index
    %9 = vector.load %arg5[%c0_7, %c0_8, %c0_9] : memref<1x64x512xbf16, #tpu.memory_space<vmem>>, vector<1x64x512xbf16>
    %10 = vector.shape_cast %9 : vector<1x64x512xbf16> to vector<64x512xbf16>
    %11 = vector.shape_cast %8 : vector<64x512xbf16> to vector<1x64x512xbf16>
    tpu.vector_store %arg5[%c0_7, %c0_8, %c0_9], %11 {strides = array<i32>} : memref<1x64x512xbf16, #tpu.memory_space<vmem>>, vector<1x64x512xbf16>,
    return
  }
  func.func @transform_0(%arg0: i32, %arg1: i32) -> (i32, i32) {
    %c0_i32 = arith.constant 0 : i32
    %c0_i32_0 = arith.constant 0 : i32
    return %arg1, %c0_i32 : i32, i32
  }
  func.func @transform_1(%arg0: i32, %arg1: i32) -> (i32, i32, i32) {
    %c0_i32 = arith.constant 0 : i32
    %c0_i32_0 = arith.constant 0 : i32
    %c0_i32_1 = arith.constant 0 : i32
    return %arg0, %c0_i32, %c0_i32_0 : i32, i32, i32
  }
  func.func @transform_2(%arg0: i32, %arg1: i32) -> (i32, i32, i32) {
    %c0_i32 = arith.constant 0 : i32
    %c0_i32_0 = arith.constant 0 : i32
    %c0_i32_1 = arith.constant 0 : i32
    return %arg0, %c0_i32, %c0_i32_0 : i32, i32, i32
  }
  func.func @transform_3(%arg0: i32, %arg1: i32) -> (i32, i32, i32) {
    %c0_i32 = arith.constant 0 : i32
    %c0_i32_0 = arith.constant 0 : i32
    return %arg0, %arg1, %c0_i32 : i32, i32, i32
  }
}

</mosaic_0001>

<llo_original>
// kernel: tpu_custom_call.1
$region0: #{tpu_custom_call.1}
  #allocation0 [shape = 'u32[]', space=smem, size = 0x4, offset = 0x4, fixed_abs, tag = 'smem constant byte address 0x4 - core index']
  #allocation1 [shape = 'u32[144,128]{1,0:T(1,128)}', space=vmem, size = 0x12000, scoped, tag = 'internal scratch']
  %s0 = inlined_call_operand.vmem [shape: bf16[64,16], index: 0, kind: input, shape index: {}]
  %s1 = inlined_call_operand.hbm [shape: bf16[2,16,512], index: 1, kind: input, shape index: {}]
  %s2 = inlined_call_operand.vmem [shape: f32[2,1,512], index: 2, kind: input, shape index: {}]
  %s3 = inlined_call_operand.hbm [shape: bf16[2,64,512], index: 3, kind: output, shape index: {}]
  %s4 = sld [smem:[#allocation0]]
  $region49: #{tpu_custom_call.1} parent=0
    _
  %s6 = ssub.s32 1, %s4
  %s7 = scalar_select 0, %s6, %s4
  $region1: #{tpu_custom_call.1} parent=0
    #allocation2 [shape = 'u8[32768]{0}', space=vmem, size = 0x8000, scoped, tag = 'input window, operand 1']
    #allocation3 [shape = 's32[2]{0}', space=sflag, size = 0x8, scoped, tag = 'scoped memory for tpu_custom_call.1']
    #allocation4 [shape = 's32[2]{0}', space=sflag, size = 0x8, scoped, tag = 'scoped memory for tpu_custom_call.1']
    #allocation5 [shape = 'u8[131072]{0}', space=vmem, size = 0x20000, scoped, tag = 'output window, operand 0']
    %8 = vsyncpa [#allocation3], 0
    %s9 = scalar_lea.sflag [#allocation3], 1
    %10 = vsyncpa %s9, 0
    %11 = vsyncpa [#allocation4], 0
    %s12 = scalar_lea.sflag [#allocation4], 1
    %13 = vsyncpa %s12, 0
    loop: start=0, step=1, limit=4
    $region2: #{tpu_custom_call.1} parent=1 // loop_pre_header
      _
    $region3: #{tpu_custom_call.1} parent=1 // loop_header
      %s15 = sphi 0, %s19
      %p16 = scmp.ge.s32.totalorder %s15, 4
      %s22 = sphi 0, %s34
      %s23 = sphi 0, %s30
      %s24 = sphi 0, %s22
      %s25 = sphi 0, %s23
      %s26 = sphi 0, %s24
      %s27 = sphi 0, %s25
      %s37 = sphi 0, %s39
      %s40 = sphi 0, %s37
      %s41 = sphi 0, %s40
      %s57 = sphi 0, %s41
      %s63 = sphi 0, %s65
      %s66 = sphi 0, %s63
      %s67 = sphi 0, %s66
      %s83 = sphi 0, %s67
      %s89 = sphi 0, %s91
      %s92 = sphi 0, %s89
      %s93 = sphi 0, %s92
      %s109 = sphi 0, %s93
      %s117 = sphi 0, %s119
      %s120 = sphi 0, %s117
      %s121 = sphi 0, %s120
      %s137 = sphi 0, %s121
    $region4: #{tpu_custom_call.1} parent=1 // loop_header_branch
      %18 = sbr.rel (%p16) target = $region8
    $region5: #{tpu_custom_call.1} parent=1 // loop_body
      %s20 = ssub.s32 %s15, 1
      %s21 = ssub.s32 %s15, 2
      %s28 = sadd.s32 1, %s23
      %p29 = scmp.ge.s32.totalorder %s28, 1
      %s30 = scalar_select %p29, 0, %s28
      %s31 = sadd.s32 1, %s22
      %s32 = scalar_select %p29, %s31, %s22
      %p33 = scmp.ge.s32.totalorder %s32, 2
      %s34 = scalar_select %p33, 0, %s32
      %s35 = ssub.s32 %s23, %s30
      %p36 = scmp.eq.s32.totalorder %s35, 0
      %s38 = sadd.s32 %s37, 1
      %s39 = scalar_select %p36, %s37, %s38
      %p42 = pneg %p36
      %p43 = scmp.eq.s32.totalorder %s15, 1
      %p44 = por %p42, %p43
      %p45 = scmp.ne.s32.totalorder %s37, %s40
      %p46 = scmp.eq.s32.totalorder %s15, 0
      %p47 = por %p45, %p46
      %p48 = scmp.ne.s32.totalorder %s37, %s40
      %p49 = scmp.eq.s32.totalorder %s20, 1
      %p50 = por %p48, %p49
      %p51 = scmp.ne.s32.totalorder %s40, %s41
      %p52 = scmp.eq.s32.totalorder %s20, 0
      %p53 = por %p51, %p52
      %p54 = scmp.ne.s32.totalorder %s40, %s41
      %p55 = scmp.eq.s32.totalorder %s21, 1
      %p56 = por %p54, %p55
      %p58 = scmp.ne.s32.totalorder %s41, %s57
      %p59 = scmp.eq.s32.totalorder %s21, 0
      %p60 = por %p58, %p59
      %s61 = ssub.s32 %s22, %s34
      %p62 = scmp.eq.s32.totalorder %s61, 0
      %s64 = sadd.s32 %s63, 1
      %s65 = scalar_select %p62, %s63, %s64
      %p68 = pneg %p62
      %p69 = scmp.eq.s32.totalorder %s15, 1
      %p70 = por %p68, %p69
      %p71 = scmp.ne.s32.totalorder %s63, %s66
      %p72 = scmp.eq.s32.totalorder %s15, 0
      %p73 = por %p71, %p72
      %p74 = scmp.ne.s32.totalorder %s63, %s66
      %p75 = scmp.eq.s32.totalorder %s20, 1
      %p76 = por %p74, %p75
      %p77 = scmp.ne.s32.totalorder %s66, %s67
      %p78 = scmp.eq.s32.totalorder %s20, 0
      %p79 = por %p77, %p78
      %p80 = scmp.ne.s32.totalorder %s66, %s67
      %p81 = scmp.eq.s32.totalorder %s21, 1
      %p82 = por %p80, %p81
      %p84 = scmp.ne.s32.totalorder %s67, %s83
      %p85 = scmp.eq.s32.totalorder %s21, 0
      %p86 = por %p84, %p85
      %s87 = ssub.s32 %s22, %s34
      %p88 = scmp.eq.s32.totalorder %s87, 0
      %s90 = sadd.s32 %s89, 1
      %s91 = scalar_select %p88, %s89, %s90
      %p94 = pneg %p88
      %p95 = scmp.eq.s32.totalorder %s15, 1
      %p96 = por %p94, %p95
      %p97 = scmp.ne.s32.totalorder %s89, %s92
      %p98 = scmp.eq.s32.totalorder %s15, 0
      %p99 = por %p97, %p98
      %p100 = scmp.ne.s32.totalorder %s89, %s92
      %p101 = scmp.eq.s32.totalorder %s20, 1
      %p102 = por %p100, %p101
      %p103 = scmp.ne.s32.totalorder %s92, %s93
      %p104 = scmp.eq.s32.totalorder %s20, 0
      %p105 = por %p103, %p104
      %p106 = scmp.ne.s32.totalorder %s92, %s93
      %p107 = scmp.eq.s32.totalorder %s21, 1
      %p108 = por %p106, %p107
      %p110 = scmp.ne.s32.totalorder %s93, %s109
      %p111 = scmp.eq.s32.totalorder %s21, 0
      %p112 = por %p110, %p111
      %s113 = ssub.s32 %s22, %s34
      %s114 = ssub.s32 %s23, %s30
      %s115 = sor.u32 %s113, %s114
      %p116 = scmp.eq.s32.totalorder %s115, 0
      %s118 = sadd.s32 %s117, 1
      %s119 = scalar_select %p116, %s117, %s118
      %p122 = pneg %p116
      %p123 = scmp.eq.s32.totalorder %s15, 1
      %p124 = por %p122, %p123
      %p125 = scmp.ne.s32.totalorder %s117, %s120
      %p126 = scmp.eq.s32.totalorder %s15, 0
      %p127 = por %p125, %p126
      %p128 = scmp.ne.s32.totalorder %s117, %s120
      %p129 = scmp.eq.s32.totalorder %s20, 1
      %p130 = por %p128, %p129
      %p131 = scmp.ne.s32.totalorder %s120, %s121
      %p132 = scmp.eq.s32.totalorder %s20, 0
      %p133 = por %p131, %p132
      %p134 = scmp.ne.s32.totalorder %s120, %s121
      %p135 = scmp.eq.s32.totalorder %s21, 1
      %p136 = por %p134, %p135
      %p138 = scmp.ne.s32.totalorder %s121, %s137
      %p139 = scmp.eq.s32.totalorder %s21, 0
      %p140 = por %p138, %p139
      %p141 = scmp.le.s32.totalorder 1, %s15
      %p142 = scmp.lt.s32.totalorder %s15, 3
      %p143 = pnand %p141, %p142
      %p144 = pneg %p143
      // Predicated region
      $region9: #{tpu_custom_call.1} parent=5 // pred_check
        _
      $region10: #{tpu_custom_call.1} parent=5 // pred_check_branch
        %146 = sbr.rel (%p143) target = $region12
      $region11: #{tpu_custom_call.1} parent=5 // pred_region
        %s147 = ssub.s32 %s15, 1
        // Predicated region
        $region13: #{tpu_custom_call.1} parent=11 // pred_check
          %p148 = pneg %p53
        $region14: #{tpu_custom_call.1} parent=11 // pred_check_branch
          %150 = sbr.rel (%p148) target = $region16
        $region15: #{tpu_custom_call.1} parent=11 // pred_region
          %s151 = smul.u32 8, %s25
          %p152 = scmp.lt.s32.totalorder %s151, 7
          %s153 = scalar_select %p152, %s151, 7
          %s154 = smul.addr %s153, 4
          %s155 = scalar_lea.vmem %s0, %s154
          %s156 = smul.u32 8, %s25
        $region16: #{tpu_custom_call.1} parent=11 // pred_fallthru
          _
      $region12: #{tpu_custom_call.1} parent=5 // pred_fallthru
        _
      %p157 = scmp.lt.s32.totalorder %s15, 2
      // Predicated region
      $region17: #{tpu_custom_call.1} parent=5 // pred_check
        %p158 = pneg %p157
      $region18: #{tpu_custom_call.1} parent=5 // pred_check_branch
        %160 = sbr.rel (%p158) target = $region20
      $region19: #{tpu_custom_call.1} parent=5 // pred_region
        // Predicated region
        $region21: #{tpu_custom_call.1} parent=19 // pred_check
          %p161 = pneg %p73
        $region22: #{tpu_custom_call.1} parent=19 // pred_check_branch
          %163 = sbr.rel (%p161) target = $region24
        $region23: #{tpu_custom_call.1} parent=19 // pred_region
          %s164 = sand.u32 %s63, 1
          %s165 = scalar_lea.sflag [#allocation3], %s164
          %s166 = sand.u32 %s63, 1
          %s167 = smul.addr %s166, 32
          %s168 = scalar_lea.vmem [#allocation2], %s167
          %s170 = ssub.s32 512, 512
          %171 = vsyncadd %s165, %s170
          %s172 = smul.addr %s22, 8
          %s173 = smul.addr %s172, 64
          %s174 = scalar_lea.hbm %s1, %s173
          %s175 = sshll.u32 %s168, 4
          %s176 = int_to_ptr.vmem [resolvable:$true] %s175
          %181 = dma.hbm_to_vmem [thread:$0]  %s174, 512, %s176, %s165, 256, 256, 16
        $region24: #{tpu_custom_call.1} parent=19 // pred_fallthru
          _
        // Predicated region
        $region25: #{tpu_custom_call.1} parent=19 // pred_check
          %p182 = pneg %p99
        $region26: #{tpu_custom_call.1} parent=19 // pred_check_branch
          %184 = sbr.rel (%p182) target = $region28
        $region27: #{tpu_custom_call.1} parent=19 // pred_region
          %p185 = scmp.lt.s32.totalorder %s22, 1
          %s186 = scalar_select %p185, %s22, 1
          %s187 = smul.addr %s186, 4
          %s188 = scalar_lea.vmem %s2, %s187
        $region28: #{tpu_custom_call.1} parent=19 // pred_fallthru
          _
      $region20: #{tpu_custom_call.1} parent=5 // pred_fallthru
        _
      %p189 = scmp.le.s32.totalorder 1, %s15
      %p190 = scmp.lt.s32.totalorder %s15, 3
      %p191 = pnand %p189, %p190
      %p192 = pneg %p191
      // Predicated region
      $region29: #{tpu_custom_call.1} parent=5 // pred_check
        _
      $region30: #{tpu_custom_call.1} parent=5 // pred_check_branch
        %194 = sbr.rel (%p191) target = $region32
      $region31: #{tpu_custom_call.1} parent=5 // pred_region
        %s195 = ssub.s32 %s15, 1
        %s196 = sand.u32 %s66, 1
        %s197 = scalar_lea.sflag [#allocation3], %s196
        %s198 = sand.u32 %s66, 1
        %s199 = smul.addr %s198, 32
        %s200 = scalar_lea.vmem [#allocation2], %s199
        // Predicated region
        $region33: #{tpu_custom_call.1} parent=31 // pred_check
          %p201 = pneg %p79
        $region34: #{tpu_custom_call.1} parent=31 // pred_check_branch
          %203 = sbr.rel (%p201) target = $region36
        $region35: #{tpu_custom_call.1} parent=31 // pred_region
          %204 = dma.done %s197, 512
        $region36: #{tpu_custom_call.1} parent=31 // pred_fallthru
          _
        %s205 = smul.u32 8, %s25
        %p206 = scmp.lt.s32.totalorder %s205, 7
        %s207 = scalar_select %p206, %s205, 7
        %s208 = smul.addr %s207, 4
        %s209 = scalar_lea.vmem %s0, %s208
        %p210 = pneg %p53
        %p211 = pneg %p50
        %s212 = sand.u32 %s66, 1
        %s213 = scalar_lea.sflag [#allocation3], %s212
        %s214 = sand.u32 %s66, 1
        %s215 = smul.addr %s214, 32
        %s216 = scalar_lea.vmem [#allocation2], %s215
        %p217 = pneg %p79
        %p218 = pneg %p76
        %p219 = scmp.lt.s32.totalorder %s24, 1
        %s220 = scalar_select %p219, %s24, 1
        %s221 = smul.addr %s220, 4
        %s222 = scalar_lea.vmem %s2, %s221
        %p223 = pneg %p105
        %p224 = pneg %p102
        %p225 = pneg %p133
        %p226 = pneg %p130
        %s227 = sand.u32 %s120, 1
        %s228 = scalar_lea.sflag [#allocation4], %s227
        %s229 = sand.u32 %s120, 1
        %s230 = smul.addr %s229, 128
        %s231 = scalar_lea.vmem [#allocation5], %s230
        %s232 = smul.u32 8, %s25
        %p233 = scmp.lt.s32.totalorder %s232, 7
        %s234 = scalar_select %p233, %s232, 7
        %s235 = smul.addr %s234, 4
        %s236 = scalar_lea.vmem %s0, %s235
        %s237 = smul.u32 8, %s25
        %p238 = scmp.lt.s32.totalorder %s24, 1
        %s239 = scalar_select %p238, %s24, 1
        %s240 = smul.addr %s239, 4
        %s241 = scalar_lea.vmem %s2, %s240
        %s242 = smul.u32 8, %s25
        %v244 = vld [vmem:[%s236] sm:$0xf]
        %v245 = vld [vmem:[%s236 + $0x4] sm:$0xf]
        %v246 = vld [vmem:[%s236 + $0x8] sm:$0xf]
        %v247 = vld [vmem:[%s236 + $0xc] sm:$0xf]
        %v248 = vld [vmem:[%s236 + $0x10] sm:$0xf]
        %v249 = vld [vmem:[%s236 + $0x14] sm:$0xf]
        %v250 = vld [vmem:[%s236 + $0x18] sm:$0xf]
        %v251 = vld [vmem:[%s236 + $0x1c] sm:$0xf]
        %v252 = vld [vmem:[%s200] sm:$0xff]
        %v253 = vld [vmem:[%s200 + $0x8] sm:$0xff]
        %v254 = vld [vmem:[%s200 + $0x10] sm:$0xff]
        %v255 = vld [vmem:[%s200 + $0x18] sm:$0xff]
        %v256 = vld [vmem:[%s241] sm:$0xf]
        %v258 = vlaneseq
        %v259 = vshrl.u32 %v258, 7
        %v260 = vsub.s32 0, %v259
        %v261 = vrot.slane %v256, %v260
        %v262 = vlaneseq
        %v263 = vshrl.u32 %v262, 7
        %v264 = vsub.s32 1, %v263
        %v265 = vrot.slane %v256, %v264
        %v266 = vlaneseq
        %v267 = vshrl.u32 %v266, 7
        %v268 = vsub.s32 2, %v267
        %v269 = vrot.slane %v256, %v268
        %v270 = vlaneseq
        %v271 = vshrl.u32 %v270, 7
        %v272 = vsub.s32 3, %v271
        %v273 = vrot.slane %v256, %v272
        %v286 = vunpack.c.l.b16 %v244
        %v287 = vunpack.c.l.b16 %v245
        %v288 = vunpack.c.l.b16 %v246
        %v289 = vunpack.c.l.b16 %v247
        %v290 = vunpack.c.l.b16 %v248
        %v291 = vunpack.c.l.b16 %v249
        %v292 = vunpack.c.l.b16 %v250
        %v293 = vunpack.c.l.b16 %v251
        %v294 = vpack.c.b16 %v287, %v286
        %v295 = vpack.c.b16 %v289, %v288
        %v296 = vpack.c.b16 %v291, %v290
        %v297 = vpack.c.b16 %v293, %v292
        %v302 = vunpack.c.l.b16 %v252
        %v303 = vunpack.c.h.b16 %v252
        %v304 = vunpack.c.l.b16 %v253
        %v305 = vunpack.c.h.b16 %v253
        %v306 = vunpack.c.l.b16 %v254
        %v307 = vunpack.c.h.b16 %v254
        %v308 = vunpack.c.l.b16 %v255
        %v309 = vunpack.c.h.b16 %v255
        %v310 = vpack.c.b16 %v306, %v302
        %v311 = vpack.c.b16 %v307, %v303
        %v312 = vpack.c.b16 %v308, %v304
        %v313 = vpack.c.b16 %v309, %v305
        %vm318 = vcmask 130048
        %v320 = vsel %vm318, %v294, 0
        %v323 = vsel %vm318, %v295, 0
        %v326 = vsel %vm318, %v296, 0
        %v329 = vsel %vm318, %v297, 0
        %331 = vmatprep.subr.bf16.mxu0 %v311
        %332 = vmatpush1.bf16.msra.mxu0 %v310
        %333 = vmatprep.subr.bf16.mxu0 0
        %334 = vmatpush1.bf16.msra.mxu0 0
        %335 = vmatprep.subr.bf16.mxu0 0
        %336 = vmatpush1.bf16.msra.mxu0 0
        %337 = vmatprep.subr.bf16.mxu0 0
        %338 = vmatpush1.bf16.msra.mxu0 0
        %339 = vmatprep.subr.bf16.mxu0 0
        %340 = vmatpush1.bf16.msra.mxu0 0
        %341 = vmatprep.subr.bf16.mxu0 0
        %342 = vmatpush1.bf16.msra.mxu0 0
        %343 = vmatprep.subr.bf16.mxu0 0
        %344 = vmatpush1.bf16.msra.mxu0 0
        %345 = vmatprep.subr.bf16.mxu0 0
        %346 = vmatpush1.bf16.msra.mxu0 0
        %347 = vmatprep.subr.bf16.mxu0 0
        %348 = vmatpush1.bf16.msra.mxu0 0
        %349 = vmatprep.subr.bf16.mxu0 0
        %350 = vmatpush1.bf16.msra.mxu0 0
        %351 = vmatprep.subr.bf16.mxu0 0
        %352 = vmatpush1.bf16.msra.mxu0 0
        %353 = vmatprep.subr.bf16.mxu0 0
        %354 = vmatpush1.bf16.msra.mxu0 0
        %355 = vmatprep.subr.bf16.mxu0 0
        %356 = vmatpush1.bf16.msra.mxu0 0
        %357 = vmatprep.subr.bf16.mxu0 0
        %358 = vmatpush1.bf16.msra.mxu0 0
        %359 = vmatprep.subr.bf16.mxu0 0
        %360 = vmatpush1.bf16.msra.mxu0 0
        %361 = vmatprep.subr.bf16.mxu0 0
        %362 = vmatpush1.bf16.msra.mxu0 0
        %363 = vmatprep.mubr.bf16.mxu0 0
        %364 = vmatmul.mubr.bf16.gmra.mrb[0].mxu0 %v320
        %v365 = vpop.f32.mrb[0].mxu0
        %v366 = vadd.f32 %v261, %v365
        %v367 = vpop.f32.mrb[0].mxu0
        %v368 = vadd.f32 %v265, %v367
        %v369 = vpop.f32.mrb[0].mxu0
        %v370 = vadd.f32 %v261, %v369
        %v371 = vpop.f32.mrb[0].mxu0
        %v372 = vadd.f32 %v265, %v371
        %373 = vmatprep.mubr.bf16.mxu0 0
        %374 = vmatmul.mubr.bf16.gmra.mrb[0].mxu0 %v323
        %v375 = vpop.f32.mrb[0].mxu0
        %v376 = vadd.f32 %v261, %v375
        %v377 = vpop.f32.mrb[0].mxu0
        %v378 = vadd.f32 %v265, %v377
        %v379 = vpop.f32.mrb[0].mxu0
        %v380 = vadd.f32 %v261, %v379
        %v381 = vpop.f32.mrb[0].mxu0
        %v382 = vadd.f32 %v265, %v381
        %383 = vmatprep.mubr.bf16.mxu0 0
        %384 = vmatmul.mubr.bf16.gmra.mrb[0].mxu0 %v326
        %v385 = vpop.f32.mrb[0].mxu0
        %v386 = vadd.f32 %v261, %v385
        %v387 = vpop.f32.mrb[0].mxu0
        %v388 = vadd.f32 %v265, %v387
        %v389 = vpop.f32.mrb[0].mxu0
        %v390 = vadd.f32 %v261, %v389
        %v391 = vpop.f32.mrb[0].mxu0
        %v392 = vadd.f32 %v265, %v391
        %393 = vmatprep.mubr.bf16.mxu0 0
        %394 = vmatmul.mubr.bf16.gmra.mrb[0].mxu0 %v329
        %v395 = vpop.f32.mrb[0].mxu0
        %v396 = vadd.f32 %v261, %v395
        %v397 = vpop.f32.mrb[0].mxu0
        %v398 = vadd.f32 %v265, %v397
        %v399 = vpop.f32.mrb[0].mxu0
        %v400 = vadd.f32 %v261, %v399
        %v401 = vpop.f32.mrb[0].mxu0
        %v402 = vadd.f32 %v265, %v401
        %403 = vdwg.mxu0
        %404 = vmatprep.subr.bf16.mxu0 %v313
        %405 = vmatpush1.bf16.msra.mxu0 %v312
        %406 = vmatprep.subr.bf16.mxu0 0
        %407 = vmatpush1.bf16.msra.mxu0 0
        %408 = vmatprep.subr.bf16.mxu0 0
        %409 = vmatpush1.bf16.msra.mxu0 0
        %410 = vmatprep.subr.bf16.mxu0 0
        %411 = vmatpush1.bf16.msra.mxu0 0
        %412 = vmatprep.subr.bf16.mxu0 0
        %413 = vmatpush1.bf16.msra.mxu0 0
        %414 = vmatprep.subr.bf16.mxu0 0
        %415 = vmatpush1.bf16.msra.mxu0 0
        %416 = vmatprep.subr.bf16.mxu0 0
        %417 = vmatpush1.bf16.msra.mxu0 0
        %418 = vmatprep.subr.bf16.mxu0 0
        %419 = vmatpush1.bf16.msra.mxu0 0
        %420 = vmatprep.subr.bf16.mxu0 0
        %421 = vmatpush1.bf16.msra.mxu0 0
        %422 = vmatprep.subr.bf16.mxu0 0
        %423 = vmatpush1.bf16.msra.mxu0 0
        %424 = vmatprep.subr.bf16.mxu0 0
        %425 = vmatpush1.bf16.msra.mxu0 0
        %426 = vmatprep.subr.bf16.mxu0 0
        %427 = vmatpush1.bf16.msra.mxu0 0
        %428 = vmatprep.subr.bf16.mxu0 0
        %429 = vmatpush1.bf16.msra.mxu0 0
        %430 = vmatprep.subr.bf16.mxu0 0
        %431 = vmatpush1.bf16.msra.mxu0 0
        %432 = vmatprep.subr.bf16.mxu0 0
        %433 = vmatpush1.bf16.msra.mxu0 0
        %434 = vmatprep.subr.bf16.mxu0 0
        %435 = vmatpush1.bf16.msra.mxu0 0
        %436 = vmatprep.mubr.bf16.mxu0 0
        %437 = vmatmul.mubr.bf16.gmra.mrb[0].mxu0 %v320
        %v438 = vpop.f32.mrb[0].mxu0
        %v439 = vadd.f32 %v269, %v438
        %v440 = vpop.f32.mrb[0].mxu0
        %v441 = vadd.f32 %v273, %v440
        %v442 = vpop.f32.mrb[0].mxu0
        %v443 = vadd.f32 %v269, %v442
        %v444 = vpop.f32.mrb[0].mxu0
        %v445 = vadd.f32 %v273, %v444
        %446 = vmatprep.mubr.bf16.mxu0 0
        %447 = vmatmul.mubr.bf16.gmra.mrb[0].mxu0 %v323
        %v448 = vpop.f32.mrb[0].mxu0
        %v449 = vadd.f32 %v269, %v448
        %v450 = vpop.f32.mrb[0].mxu0
        %v451 = vadd.f32 %v273, %v450
        %v452 = vpop.f32.mrb[0].mxu0
        %v453 = vadd.f32 %v269, %v452
        %v454 = vpop.f32.mrb[0].mxu0
        %v455 = vadd.f32 %v273, %v454
        %456 = vmatprep.mubr.bf16.mxu0 0
        %457 = vmatmul.mubr.bf16.gmra.mrb[0].mxu0 %v326
        %v458 = vpop.f32.mrb[0].mxu0
        %v459 = vadd.f32 %v269, %v458
        %v460 = vpop.f32.mrb[0].mxu0
        %v461 = vadd.f32 %v273, %v460
        %v462 = vpop.f32.mrb[0].mxu0
        %v463 = vadd.f32 %v269, %v462
        %v464 = vpop.f32.mrb[0].mxu0
        %v465 = vadd.f32 %v273, %v464
        %466 = vmatprep.mubr.bf16.mxu0 0
        %467 = vmatmul.mubr.bf16.gmra.mrb[0].mxu0 %v329
        %v468 = vpop.f32.mrb[0].mxu0
        %v469 = vadd.f32 %v269, %v468
        %v470 = vpop.f32.mrb[0].mxu0
        %v471 = vadd.f32 %v273, %v470
        %v472 = vpop.f32.mrb[0].mxu0
        %v473 = vadd.f32 %v269, %v472
        %v474 = vpop.f32.mrb[0].mxu0
        %v475 = vadd.f32 %v273, %v474
        %476 = vdwg.mxu0
        %v477 = vpack.c.bf16 %v370, %v366
        %v478 = vpack.c.bf16 %v372, %v368
        %v479 = vpack.c.bf16 %v443, %v439
        %v480 = vpack.c.bf16 %v445, %v441
        %v481 = vpack.c.bf16 %v380, %v376
        %v482 = vpack.c.bf16 %v382, %v378
        %v483 = vpack.c.bf16 %v453, %v449
        %v484 = vpack.c.bf16 %v455, %v451
        %v485 = vpack.c.bf16 %v390, %v386
        %v486 = vpack.c.bf16 %v392, %v388
        %v487 = vpack.c.bf16 %v463, %v459
        %v488 = vpack.c.bf16 %v465, %v461
        %v489 = vpack.c.bf16 %v400, %v396
        %v490 = vpack.c.bf16 %v402, %v398
        %v491 = vpack.c.bf16 %v473, %v469
        %v492 = vpack.c.bf16 %v475, %v471
        %v509 = vunpack.c.l.b16 %v477
        %v510 = vunpack.c.l.b16 %v478
        %v511 = vunpack.c.l.b16 %v479
        %v512 = vunpack.c.l.b16 %v480
        %v513 = vunpack.c.h.b16 %v477
        %v514 = vunpack.c.h.b16 %v478
        %v515 = vunpack.c.h.b16 %v479
        %v516 = vunpack.c.h.b16 %v480
        %v517 = vunpack.c.l.b16 %v481
        %v518 = vunpack.c.l.b16 %v482
        %v519 = vunpack.c.l.b16 %v483
        %v520 = vunpack.c.l.b16 %v484
        %v521 = vunpack.c.h.b16 %v481
        %v522 = vunpack.c.h.b16 %v482
        %v523 = vunpack.c.h.b16 %v483
        %v524 = vunpack.c.h.b16 %v484
        %v525 = vunpack.c.l.b16 %v485
        %v526 = vunpack.c.l.b16 %v486
        %v527 = vunpack.c.l.b16 %v487
        %v528 = vunpack.c.l.b16 %v488
        %v529 = vunpack.c.h.b16 %v485
        %v530 = vunpack.c.h.b16 %v486
        %v531 = vunpack.c.h.b16 %v487
        %v532 = vunpack.c.h.b16 %v488
        %v533 = vunpack.c.l.b16 %v489
        %v534 = vunpack.c.l.b16 %v490
        %v535 = vunpack.c.l.b16 %v491
        %v536 = vunpack.c.l.b16 %v492
        %v537 = vunpack.c.h.b16 %v489
        %v538 = vunpack.c.h.b16 %v490
        %v539 = vunpack.c.h.b16 %v491
        %v540 = vunpack.c.h.b16 %v492
        %v541 = vpack.c.b16 %v510, %v509
        %v542 = vpack.c.b16 %v512, %v511
        %v543 = vpack.c.b16 %v514, %v513
        %v544 = vpack.c.b16 %v516, %v515
        %v545 = vpack.c.b16 %v518, %v517
        %v546 = vpack.c.b16 %v520, %v519
        %v547 = vpack.c.b16 %v522, %v521
        %v548 = vpack.c.b16 %v524, %v523
        %v549 = vpack.c.b16 %v526, %v525
        %v550 = vpack.c.b16 %v528, %v527
        %v551 = vpack.c.b16 %v530, %v529
        %v552 = vpack.c.b16 %v532, %v531
        %v553 = vpack.c.b16 %v534, %v533
        %v554 = vpack.c.b16 %v536, %v535
        %v555 = vpack.c.b16 %v538, %v537
        %v556 = vpack.c.b16 %v540, %v539
        %573 = vst [vmem:[%s231] sm:$0xff] %v541
        %574 = vst [vmem:[%s231 + $0x8] sm:$0xff] %v542
        %575 = vst [vmem:[%s231 + $0x10] sm:$0xff] %v543
        %576 = vst [vmem:[%s231 + $0x18] sm:$0xff] %v544
        %577 = vst [vmem:[%s231 + $0x20] sm:$0xff] %v545
        %578 = vst [vmem:[%s231 + $0x28] sm:$0xff] %v546
        %579 = vst [vmem:[%s231 + $0x30] sm:$0xff] %v547
        %580 = vst [vmem:[%s231 + $0x38] sm:$0xff] %v548
        %581 = vst [vmem:[%s231 + $0x40] sm:$0xff] %v549
        %582 = vst [vmem:[%s231 + $0x48] sm:$0xff] %v550
        %583 = vst [vmem:[%s231 + $0x50] sm:$0xff] %v551
        %584 = vst [vmem:[%s231 + $0x58] sm:$0xff] %v552
        %585 = vst [vmem:[%s231 + $0x60] sm:$0xff] %v553
        %586 = vst [vmem:[%s231 + $0x68] sm:$0xff] %v554
        %587 = vst [vmem:[%s231 + $0x70] sm:$0xff] %v555
        %588 = vst [vmem:[%s231 + $0x78] sm:$0xff] %v556
        %s589 = sand.u32 %s120, 1
        %s590 = scalar_lea.sflag [#allocation4], %s589
        %s591 = sand.u32 %s120, 1
        %s592 = smul.addr %s591, 128
        %s593 = scalar_lea.vmem [#allocation5], %s592
        // Predicated region
        $region37: #{tpu_custom_call.1} parent=31 // pred_check
          %p594 = pneg %p130
        $region38: #{tpu_custom_call.1} parent=31 // pred_check_branch
          %596 = sbr.rel (%p594) target = $region40
        $region39: #{tpu_custom_call.1} parent=31 // pred_region
          %s597 = smul.u32 8, %s25
          %s599 = ssub.s32 2048, 2048
          %600 = vsyncadd %s590, %s599
          %s601 = smul.addr %s597, 4
          %s602 = smul.addr %s24, 32
          %s603 = sadd.s32 %s601, %s602
          %s604 = smul.addr %s603, 64
          %s605 = scalar_lea.hbm %s3, %s604
          %s606 = sshll.u32 %s593, 4
          %s607 = int_to_ptr.vmem [resolvable:$true] %s606
          %612 = dma.vmem_to_hbm [thread:$0]  %s607, 2048, %s605, %s590, 256, 256, 16
        $region40: #{tpu_custom_call.1} parent=31 // pred_fallthru
          _
      $region32: #{tpu_custom_call.1} parent=5 // pred_fallthru
        _
      %p613 = scmp.le.s32.totalorder 2, %s15
      // Predicated region
      $region41: #{tpu_custom_call.1} parent=5 // pred_check
        %p614 = pneg %p613
      $region42: #{tpu_custom_call.1} parent=5 // pred_check_branch
        %616 = sbr.rel (%p614) target = $region44
      $region43: #{tpu_custom_call.1} parent=5 // pred_region
        %s617 = ssub.s32 %s15, 2
        // Predicated region
        $region45: #{tpu_custom_call.1} parent=43 // pred_check
          %p618 = pneg %p136
        $region46: #{tpu_custom_call.1} parent=43 // pred_check_branch
          %620 = sbr.rel (%p618) target = $region48
        $region47: #{tpu_custom_call.1} parent=43 // pred_region
          %s621 = sand.u32 %s121, 1
          %s622 = scalar_lea.sflag [#allocation4], %s621
          %s623 = sand.u32 %s121, 1
          %s624 = smul.addr %s623, 128
          %s625 = scalar_lea.vmem [#allocation5], %s624
          %626 = dma.done %s622, 2048
        $region48: #{tpu_custom_call.1} parent=43 // pred_fallthru
          _
      $region44: #{tpu_custom_call.1} parent=5 // pred_fallthru
        _
    $region6: #{tpu_custom_call.1} parent=1 // loop_footer
      %s19 = sadd.s32 1, %s15
    $region7: #{tpu_custom_call.1} parent=1 // loop_footer_branch
      %14 = sbr.rel target = $region3
    $region8: #{tpu_custom_call.1} parent=1 // loop_exit
      _
    %627 = vsyncpa [#allocation3], 1
    %s628 = scalar_lea.sflag [#allocation3], 1
    %629 = vsyncpa %s628, 1
    %630 = vsyncpa [#allocation4], 1
    %s631 = scalar_lea.sflag [#allocation4], 1
    %632 = vsyncpa %s631, 1

</llo_original>
